<compile_context>
chip_gen: v6e
topology: v6e:2x2x1
jax: 0.10.0
libtpu: 0.0.40
codegen_flags: <defaults>
</compile_context>

<pallas_src>
import math

import jax
import jax.numpy as jnp
import numpy as np
from jax.experimental import pallas as pl
from jax.experimental.pallas import tpu as pltpu


# ---------------------------------------------------------------------------
# Host-side, one-time constant construction (hoist out of the forward path).
# ---------------------------------------------------------------------------

def _src_index(p, up_size, r):
    """Padded-upsampled index p in [0, up_size+2) -> original-resolution index.

    ReflectionPad2d(1) applied on the nearest-upsampled (x r) axis."""
    u = p - 1
    if u < 0:
        u = -u                       # reflect at the low edge (pad = 1)
    if u >= up_size:
        u = 2 * up_size - 2 - u      # reflect at the high edge (pad = 1)
    return u // r


def _build_gather_constants(H, W, r):
    """Constant 0/1 gather matrices implementing upsample + reflect-pad + tap shift."""
    Ho, Wo = H * r, W * r
    prow = [_src_index(p, Ho, r) for p in range(Ho + 2)]
    pcol = [_src_index(q, Wo, r) for q in range(Wo + 2)]

    # E[kh][y, h] = 1  iff  h == prow[y + kh]   (rows: upsample + pad + kh shift)
    E = np.zeros((3, Ho, H), np.float32)
    for kh in range(3):
        for y in range(Ho):
            E[kh, y, prow[y + kh]] = 1.0

    # Ccol[kw][x, w] = 1 iff w == pcol[x + kw]  (cols: upsample + pad + kw shift)
    Ccol = np.zeros((3, Wo, W), np.float32)
    for kw in range(3):
        for x in range(Wo):
            Ccol[kw, x, pcol[x + kw]] = 1.0
    return E, Ccol


def _pick_batch_tile(n, max_tile=8):
    """Images per grid step. Keep >= 2 grid steps when n allows (v7x megacore)."""
    bt = max(1, min(max_tile, n))
    while bt > 1 and (n + bt - 1) // bt < 2:
        bt -= 1
    return bt


def make_resize_conv_constants(w_hwio, bias, H, W, upsample_ratio, batch_size_hint):
    """Fold upsample + reflect-pad + conv taps into matmul constants (run once)."""
    r = int(upsample_ratio)
    _, _, Cin, Cout = w_hwio.shape
    Ho, Wo = H * r, W * r
    CinW, CWo = Cin * W, Cout * Wo
    bt = _pick_batch_tile(int(batch_size_hint))

    E_np, Ccol_np = _build_gather_constants(H, W, r)

    # D[kh, c*W + w, co*Wo + x] = sum_kw w[kh, kw, c, co] * Ccol[kw, x, w]
    D = jnp.einsum('aqco,qxw->acwox',
                   w_hwio.astype(jnp.float32), jnp.asarray(Ccol_np))
    D = D.reshape(3, CinW, CWo)
    # Concatenate the three kh taps along the lane axis -> one stage-1 matmul.
    d_cat = jnp.transpose(D, (1, 0, 2)).reshape(CinW, 3 * CWo).astype(jnp.bfloat16)

    # Row gather, replicated block-diagonally over the batch tile so stage 2
    # needs no per-image loop:  E_big[kh, b*Ho+y, b*H+h] = E[kh, y, h].
    eye = np.eye(bt, dtype=np.float32)
    e_big_np = np.stack([np.kron(eye, E_np[kh]) for kh in range(3)], axis=0)
    e_big = jnp.asarray(e_big_np).astype(jnp.bfloat16)        # exact (0/1 values)

    b_flat = jnp.repeat(bias.astype(jnp.float32), Wo).reshape(1, CWo)

    return dict(d_cat=d_cat, e_big=e_big, b_flat=b_flat,
                batch_tile=bt, Cin=Cin, Cout=Cout, H=H, W=W, r=r,
                Ho=Ho, Wo=Wo, CinW=CinW, CWo=CWo)


# ---------------------------------------------------------------------------
# Pallas kernel
# ---------------------------------------------------------------------------

def resize_conv_kernel(x_ref, d_ref, e_ref, b_ref, o_ref):
    """One batch tile per grid step.

    x_ref: (BT, H, Cin*W)         original-resolution images (rows on sublanes)
    d_ref: (Cin*W, 3*Cout*Wo)     bf16; column gather + kw taps, kh taps on lanes
    e_ref: (3, BT*Ho, BT*H)       bf16; row gather per kh tap, block-diag in batch
    b_ref: (1, Cout*Wo)           f32 bias, pre-broadcast along the lane axis
    o_ref: (BT, Ho, Cout*Wo)      lane-dense output slab
    """
    bt, h, cinw = x_ref.shape
    _, ho, cwo = o_ref.shape

    # (BT, H, CinW) -> (BT*H, CinW): leading-dim merge, free.
    xr = x_ref[...].reshape(bt * h, cinw).astype(jnp.bfloat16)

    # Stage 1: column upsample/pad + kw conv taps. ONE bf16 MXU matmul producing
    # all three kh taps side by side on the lane axis, f32 accumulation.
    m = jnp.dot(xr, d_ref[...], preferred_element_type=jnp.float32)   # (BT*H, 3*CWo)
    m = m.astype(jnp.bfloat16)

    # Stage 2: row upsample/pad + kh taps over the whole batch tile.
    # Lane slices at multiples of CWo (multiple of 128) are aligned and free.
    acc = jnp.dot(e_ref[0], m[:, :cwo], preferred_element_type=jnp.float32)
    acc = acc + jnp.dot(e_ref[1], m[:, cwo:2 * cwo], preferred_element_type=jnp.float32)
    acc = acc + jnp.dot(e_ref[2], m[:, 2 * cwo:], preferred_element_type=jnp.float32)

    acc = acc + b_ref[...]                                            # (BT*Ho, CWo)
    o_ref[...] = acc.reshape(bt, ho, cwo).astype(o_ref.dtype)         # free split


# ---------------------------------------------------------------------------
# Wrappers
# ---------------------------------------------------------------------------

def resize_conv_slab(x_slab, consts):
    """Slab-layout forward: (N, H, Cin*W) -> (N, Ho, Cout*Wo).

    Use this entry point directly when chaining ResizeConv layers so
    activations stay in the slab layout (no NCHW transposes between layers)."""
    N, H, CinW = x_slab.shape
    bt = consts['batch_tile']
    Ho, CWo = consts['Ho'], consts['CWo']
    d_cat, e_big, b_flat = consts['d_cat'], consts['e_big'], consts['b_flat']

    n_tiles = (N + bt - 1) // bt
    n_pad = n_tiles * bt
    if n_pad != N:
        x_slab = jnp.pad(x_slab, ((0, n_pad - N), (0, 0), (0, 0)))

    out = pl.pallas_call(
        resize_conv_kernel,
        out_shape=jax.ShapeDtypeStruct((n_pad, Ho, CWo), x_slab.dtype),
        grid=(n_tiles,),
        in_specs=[
            pl.BlockSpec((bt, H, CinW), lambda n: (n, 0, 0)),
            # Constants: index_map never changes -> single-buffer them.
            pl.BlockSpec((CinW, 3 * CWo), lambda n: (0, 0),
                         pipeline_mode=pl.Buffered(1)),
            pl.BlockSpec((3, bt * Ho, bt * H), lambda n: (0, 0, 0),
                         pipeline_mode=pl.Buffered(1)),
            pl.BlockSpec((1, CWo), lambda n: (0, 0),
                         pipeline_mode=pl.Buffered(1)),
        ],
        out_specs=pl.BlockSpec((bt, Ho, CWo), lambda n: (n, 0, 0)),
        compiler_params=pltpu.CompilerParams(
            dimension_semantics=("parallel",)),
    )(x_slab, d_cat, e_big, b_flat)

    return out[:N] if n_pad != N else out


def resize_conv(x_nchw, consts):
    """NCHW-compatible forward: (N, Cin, H, W) -> (N, Cout, H*r, W*r)."""
    N, Cin, H, W = x_nchw.shape
    Cout, Ho, Wo = consts['Cout'], consts['Ho'], consts['Wo']
    # NOTE: these two layout transposes are full-tensor XLA passes; when layers
    # are chained, stay in the slab layout and call resize_conv_slab instead.
    x_slab = jnp.transpose(x_nchw, (0, 2, 1, 3)).reshape(N, H, Cin * W)
    out2 = resize_conv_slab(x_slab, consts)
    return jnp.transpose(out2.reshape(N, Ho, Cout, Wo), (0, 2, 1, 3))


# ---------------------------------------------------------------------------
# Pure-JAX reference (matches the PyTorch module semantics)
# ---------------------------------------------------------------------------

def reference(x_nchw, w_hwio, b, r):
    x_up = jnp.repeat(jnp.repeat(x_nchw, r, axis=2), r, axis=3)
    x_pad = jnp.pad(x_up, ((0, 0), (0, 0), (1, 1), (1, 1)), mode="reflect")
    w_oihw = jnp.transpose(w_hwio, (3, 2, 0, 1))
    y = jax.lax.conv_general_dilated(
        x_pad, w_oihw, window_strides=(1, 1), padding="VALID",
        dimension_numbers=("NCHW", "OIHW", "NCHW"),
    )
    return y + b.reshape(1, -1, 1, 1)


if __name__ == "__main__":
    # ResizeConv(4, 8, upsample_ratio=2, kernel=3, stride=1, pad=0, 'nearest')
    N, Cin, H, W = 2, 4, 16, 16
    Cout, r = 8, 2

    key = jax.random.PRNGKey(0)
    kx, kw_, kb = jax.random.split(key, 3)

    x = jax.random.normal(kx, (N, Cin, H, W), dtype=jnp.float32)

    # kaiming_normal_(mode='fan_out', nonlinearity='relu'): std = sqrt(2/(Cout*kh*kw))
    fan_out = Cout * 3 * 3
    std = math.sqrt(2.0 / fan_out)
    w = jax.random.normal(kw_, (3, 3, Cin, Cout), dtype=jnp.float32) * std  # HWIO
    # Module inits bias to 0; use a small nonzero bias to exercise the bias path.
    b = jax.random.normal(kb, (Cout,), dtype=jnp.float32) * 0.1

    # Constants are built once (per weight update), not per forward call.
    consts = make_resize_conv_constants(w, b, H, W, r, batch_size_hint=N)

    out = jax.block_until_ready(resize_conv(x, consts))
    ref = jax.block_until_ready(reference(x, w, b, r))

    assert out.shape == (N, Cout, H * r, W * r), out.shape
    # bf16 operands with f32 accumulation: loosened tolerance per review.
    assert np.allclose(np.asarray(out), np.asarray(ref), atol=5e-2, rtol=5e-2), \
        float(np.max(np.abs(np.asarray(out) - np.asarray(ref))))

    print("KERNEL_OK")
</pallas_src>

<mosaic_0001>
module attributes {stable_mosaic.version = 11 : i64} {
  func.func @resize_conv_kernel(%arg0: i32, %arg1: memref<1x16x64xf32, #tpu.memory_space<vmem>>, %arg2: memref<64x768xbf16, #tpu.memory_space<vmem>>, %arg3: memref<3x32x16xbf16, #tpu.memory_space<vmem>>, %arg4: memref<1x256xf32, #tpu.memory_space<vmem>>, %arg5: memref<1x32x256xf32, #tpu.memory_space<vmem>>) attributes {dimension_semantics = [#tpu.dimension_semantics<parallel>], iteration_bounds = array<i64: 2>, scalar_prefetch = 0 : i64, scratch_operands = 0 : i64, tpu.core_type = #tpu.core_type<tc>, window_params = [{transform_indices = @transform_0, window_bounds = array<i64: 1, 16, 64>}, {pipeline_mode = #tpu.pipeline_mode<synchronous>, transform_indices = @transform_1, window_bounds = array<i64: 64, 768>}, {pipeline_mode = #tpu.pipeline_mode<synchronous>, transform_indices = @transform_2, window_bounds = array<i64: 3, 32, 16>}, {pipeline_mode = #tpu.pipeline_mode<synchronous>, transform_indices = @transform_3, window_bounds = array<i64: 1, 256>}, {transform_indices = @transform_4, window_bounds = array<i64: 1, 32, 256>}]} {
    %c0 = arith.constant 0 : index
    %c0_0 = arith.constant 0 : index
    %c0_1 = arith.constant 0 : index
    %0 = vector.load %arg1[%c0, %c0_0, %c0_1] : memref<1x16x64xf32, #tpu.memory_space<vmem>>, vector<1x16x64xf32>
    %1 = vector.shape_cast %0 : vector<1x16x64xf32> to vector<16x64xf32>
    %2 = arith.truncf %1 : vector<16x64xf32> to vector<16x64xbf16>
    %c0_2 = arith.constant 0 : index
    %c0_3 = arith.constant 0 : index
    %3 = vector.load %arg2[%c0_2, %c0_3] : memref<64x768xbf16, #tpu.memory_space<vmem>>, vector<64x768xbf16>
    %cst = arith.constant dense<0.000000e+00> : vector<16x768xf32>
    %4 = tpu.matmul %2, %3, %cst {dimension_numbers = #tpu.dot_dimension_numbers<[1], [0], [0], [1], [0, 0, 1, 1], [], []>} : vector<16x64xbf16>, vector<64x768xbf16>, vector<16x768xf32> -> vector<16x768xf32>
    %5 = arith.truncf %4 : vector<16x768xf32> to vector<16x768xbf16>
    %c0_4 = arith.constant 0 : index
    %c0_5 = arith.constant 0 : index
    %c0_6 = arith.constant 0 : index
    %6 = vector.load %arg3[%c0_4, %c0_5, %c0_6] : memref<3x32x16xbf16, #tpu.memory_space<vmem>>, vector<1x32x16xbf16>
    %7 = vector.shape_cast %6 : vector<1x32x16xbf16> to vector<32x16xbf16>
    %8 = vector.extract_strided_slice %5 {offsets = [0, 0], sizes = [16, 256], strides = [1, 1]} : vector<16x768xbf16> to vector<16x256xbf16>
    %cst_7 = arith.constant dense<0.000000e+00> : vector<32x256xf32>
    %9 = tpu.matmul %7, %8, %cst_7 {dimension_numbers = #tpu.dot_dimension_numbers<[1], [0], [0], [1], [0, 0, 1, 1], [], []>} : vector<32x16xbf16>, vector<16x256xbf16>, vector<32x256xf32> -> vector<32x256xf32>
    %c1 = arith.constant 1 : index
    %c0_8 = arith.constant 0 : index
    %c0_9 = arith.constant 0 : index
    %10 = vector.load %arg3[%c1, %c0_8, %c0_9] : memref<3x32x16xbf16, #tpu.memory_space<vmem>>, vector<1x32x16xbf16>
    %11 = vector.shape_cast %10 : vector<1x32x16xbf16> to vector<32x16xbf16>
    %12 = vector.extract_strided_slice %5 {offsets = [0, 256], sizes = [16, 256], strides = [1, 1]} : vector<16x768xbf16> to vector<16x256xbf16>
    %cst_10 = arith.constant dense<0.000000e+00> : vector<32x256xf32>
    %13 = tpu.matmul %11, %12, %cst_10 {dimension_numbers = #tpu.dot_dimension_numbers<[1], [0], [0], [1], [0, 0, 1, 1], [], []>} : vector<32x16xbf16>, vector<16x256xbf16>, vector<32x256xf32> -> vector<32x256xf32>
    %14 = arith.addf %9, %13 : vector<32x256xf32>
    %c2 = arith.constant 2 : index
    %c0_11 = arith.constant 0 : index
    %c0_12 = arith.constant 0 : index
    %15 = vector.load %arg3[%c2, %c0_11, %c0_12] : memref<3x32x16xbf16, #tpu.memory_space<vmem>>, vector<1x32x16xbf16>
    %16 = vector.shape_cast %15 : vector<1x32x16xbf16> to vector<32x16xbf16>
    %17 = vector.extract_strided_slice %5 {offsets = [0, 512], sizes = [16, 256], strides = [1, 1]} : vector<16x768xbf16> to vector<16x256xbf16>
    %cst_13 = arith.constant dense<0.000000e+00> : vector<32x256xf32>
    %18 = tpu.matmul %16, %17, %cst_13 {dimension_numbers = #tpu.dot_dimension_numbers<[1], [0], [0], [1], [0, 0, 1, 1], [], []>} : vector<32x16xbf16>, vector<16x256xbf16>, vector<32x256xf32> -> vector<32x256xf32>
    %19 = arith.addf %14, %18 : vector<32x256xf32>
    %c0_14 = arith.constant 0 : index
    %c0_15 = arith.constant 0 : index
    %20 = vector.load %arg4[%c0_14, %c0_15] : memref<1x256xf32, #tpu.memory_space<vmem>>, vector<1x256xf32>
    %21 = vector.broadcast %20 : vector<1x256xf32> to vector<32x256xf32>
    %22 = arith.addf %19, %21 : vector<32x256xf32>
    %23 = vector.shape_cast %22 : vector<32x256xf32> to vector<1x32x256xf32>
    %c0_16 = arith.constant 0 : index
    %c0_17 = arith.constant 0 : index
    %c0_18 = arith.constant 0 : index
    %24 = vector.load %arg5[%c0_16, %c0_17, %c0_18] : memref<1x32x256xf32, #tpu.memory_space<vmem>>, vector<1x32x256xf32>
    tpu.vector_store %arg5[%c0_16, %c0_17, %c0_18], %23 {strides = array<i32>} : memref<1x32x256xf32, #tpu.memory_space<vmem>>, vector<1x32x256xf32>,
    return
  }
  func.func @transform_0(%arg0: i32) -> (i32, i32, i32) {
    %c0_i32 = arith.constant 0 : i32
    %c0_i32_0 = arith.constant 0 : i32
    %c0_i32_1 = arith.constant 0 : i32
    return %arg0, %c0_i32, %c0_i32_0 : i32, i32, i32
  }
  func.func @transform_1(%arg0: i32) -> (i32, i32) {
    %c0_i32 = arith.constant 0 : i32
    %c0_i32_0 = arith.constant 0 : i32
    %c0_i32_1 = arith.constant 0 : i32
    return %c0_i32, %c0_i32_0 : i32, i32
  }
  func.func @transform_2(%arg0: i32) -> (i32, i32, i32) {
    %c0_i32 = arith.constant 0 : i32
    %c0_i32_0 = arith.constant 0 : i32
    %c0_i32_1 = arith.constant 0 : i32
    %c0_i32_2 = arith.constant 0 : i32
    return %c0_i32, %c0_i32_0, %c0_i32_1 : i32, i32, i32
  }
  func.func @transform_3(%arg0: i32) -> (i32, i32) {
    %c0_i32 = arith.constant 0 : i32
    %c0_i32_0 = arith.constant 0 : i32
    %c0_i32_1 = arith.constant 0 : i32
    return %c0_i32, %c0_i32_0 : i32, i32
  }
  func.func @transform_4(%arg0: i32) -> (i32, i32, i32) {
    %c0_i32 = arith.constant 0 : i32
    %c0_i32_0 = arith.constant 0 : i32
    %c0_i32_1 = arith.constant 0 : i32
    return %arg0, %c0_i32, %c0_i32_0 : i32, i32, i32
  }
}

</mosaic_0001>

<llo_original>
// kernel: tpu_custom_call.1
$region0: #{tpu_custom_call.1}
  #allocation0 [shape = 'u32[]', space=smem, size = 0x4, offset = 0x4, fixed_abs, tag = 'smem constant byte address 0x4 - core index']
  #allocation1 [shape = 'u32[144,128]{1,0:T(1,128)}', space=vmem, size = 0x12000, scoped, tag = 'internal scratch']
  %s0 = inlined_call_operand.vmem [shape: f32[2,16,64], index: 0, kind: input, shape index: {}]
  %s1 = inlined_call_operand.hbm [shape: bf16[64,768], index: 1, kind: input, shape index: {}]
  %s2 = inlined_call_operand.vmem [shape: bf16[3,32,16], index: 2, kind: input, shape index: {}]
  %s3 = inlined_call_operand.vmem [shape: f32[1,256], index: 3, kind: input, shape index: {}]
  %s4 = inlined_call_operand.hbm [shape: f32[2,32,256], index: 4, kind: output, shape index: {}]
  %s5 = sld [smem:[#allocation0]]
  $region53: #{tpu_custom_call.1} parent=0
    _
  %s7 = ssub.s32 1, %s5
  %s8 = scalar_select 0, %s7, %s5
  $region1: #{tpu_custom_call.1} parent=0
    #allocation2 [shape = 'u8[98304]{0}', space=vmem, size = 0x18000, scoped, tag = 'input window, operand 1, single buffered']
    #allocation3 [shape = 's32[2]{0}', space=sflag, size = 0x8, scoped, tag = 'scoped memory for tpu_custom_call.1']
    #allocation4 [shape = 's32[2]{0}', space=sflag, size = 0x8, scoped, tag = 'scoped memory for tpu_custom_call.1']
    #allocation5 [shape = 'u8[65536]{0}', space=vmem, size = 0x10000, scoped, tag = 'output window, operand 0']
    %9 = vsyncpa [#allocation3], 0
    %10 = vsyncpa [#allocation4], 0
    %s11 = scalar_lea.sflag [#allocation4], 1
    %12 = vsyncpa %s11, 0
    loop: start=0, step=1, limit=4
    $region2: #{tpu_custom_call.1} parent=1 // loop_pre_header
      _
    $region3: #{tpu_custom_call.1} parent=1 // loop_header
      %s14 = sphi 0, %s18
      %p15 = scmp.ge.s32.totalorder %s14, 4
      %s24 = sphi 0, %s26
      %s27 = sphi 0, %s24
      %s28 = sphi 0, %s27
      %s44 = sphi 0, %s28
      %s48 = sphi 0, %s48
      %s50 = sphi 0, %s48
      %s51 = sphi 0, %s50
      %s65 = sphi 0, %s51
      %s69 = sphi 0, %s69
      %s71 = sphi 0, %s69
      %s72 = sphi 0, %s71
      %s86 = sphi 0, %s72
      %s90 = sphi 0, %s90
      %s92 = sphi 0, %s90
      %s93 = sphi 0, %s92
      %s107 = sphi 0, %s93
      %s113 = sphi 0, %s115
      %s116 = sphi 0, %s113
      %s117 = sphi 0, %s116
      %s133 = sphi 0, %s117
    $region4: #{tpu_custom_call.1} parent=1 // loop_header_branch
      %17 = sbr.rel (%p15) target = $region8
    $region5: #{tpu_custom_call.1} parent=1 // loop_body
      %s19 = ssub.s32 %s14, 1
      %s20 = ssub.s32 %s14, 2
      %s21 = sadd.s32 %s14, 1
      %s22 = ssub.s32 %s14, %s21
      %p23 = scmp.eq.s32.totalorder %s22, 0
      %s25 = sadd.s32 %s24, 1
      %s26 = scalar_select %p23, %s24, %s25
      %p29 = pneg %p23
      %p30 = scmp.eq.s32.totalorder %s14, 1
      %p31 = por %p29, %p30
      %p32 = scmp.ne.s32.totalorder %s24, %s27
      %p33 = scmp.eq.s32.totalorder %s14, 0
      %p34 = por %p32, %p33
      %p35 = scmp.ne.s32.totalorder %s24, %s27
      %p36 = scmp.eq.s32.totalorder %s19, 1
      %p37 = por %p35, %p36
      %p38 = scmp.ne.s32.totalorder %s27, %s28
      %p39 = scmp.eq.s32.totalorder %s19, 0
      %p40 = por %p38, %p39
      %p41 = scmp.ne.s32.totalorder %s27, %s28
      %p42 = scmp.eq.s32.totalorder %s20, 1
      %p43 = por %p41, %p42
      %p45 = scmp.ne.s32.totalorder %s28, %s44
      %p46 = scmp.eq.s32.totalorder %s20, 0
      %p47 = por %p45, %p46
      %s49 = sadd.s32 %s48, 1
      %p52 = scmp.eq.s32.totalorder %s14, 1
      %p53 = scmp.ne.s32.totalorder %s48, %s50
      %p54 = scmp.eq.s32.totalorder %s14, 0
      %p55 = por %p53, %p54
      %p56 = scmp.ne.s32.totalorder %s48, %s50
      %p57 = scmp.eq.s32.totalorder %s19, 1
      %p58 = por %p56, %p57
      %p59 = scmp.ne.s32.totalorder %s50, %s51
      %p60 = scmp.eq.s32.totalorder %s19, 0
      %p61 = por %p59, %p60
      %p62 = scmp.ne.s32.totalorder %s50, %s51
      %p63 = scmp.eq.s32.totalorder %s20, 1
      %p64 = por %p62, %p63
      %p66 = scmp.ne.s32.totalorder %s51, %s65
      %p67 = scmp.eq.s32.totalorder %s20, 0
      %p68 = por %p66, %p67
      %s70 = sadd.s32 %s69, 1
      %p73 = scmp.eq.s32.totalorder %s14, 1
      %p74 = scmp.ne.s32.totalorder %s69, %s71
      %p75 = scmp.eq.s32.totalorder %s14, 0
      %p76 = por %p74, %p75
      %p77 = scmp.ne.s32.totalorder %s69, %s71
      %p78 = scmp.eq.s32.totalorder %s19, 1
      %p79 = por %p77, %p78
      %p80 = scmp.ne.s32.totalorder %s71, %s72
      %p81 = scmp.eq.s32.totalorder %s19, 0
      %p82 = por %p80, %p81
      %p83 = scmp.ne.s32.totalorder %s71, %s72
      %p84 = scmp.eq.s32.totalorder %s20, 1
      %p85 = por %p83, %p84
      %p87 = scmp.ne.s32.totalorder %s72, %s86
      %p88 = scmp.eq.s32.totalorder %s20, 0
      %p89 = por %p87, %p88
      %s91 = sadd.s32 %s90, 1
      %p94 = scmp.eq.s32.totalorder %s14, 1
      %p95 = scmp.ne.s32.totalorder %s90, %s92
      %p96 = scmp.eq.s32.totalorder %s14, 0
      %p97 = por %p95, %p96
      %p98 = scmp.ne.s32.totalorder %s90, %s92
      %p99 = scmp.eq.s32.totalorder %s19, 1
      %p100 = por %p98, %p99
      %p101 = scmp.ne.s32.totalorder %s92, %s93
      %p102 = scmp.eq.s32.totalorder %s19, 0
      %p103 = por %p101, %p102
      %p104 = scmp.ne.s32.totalorder %s92, %s93
      %p105 = scmp.eq.s32.totalorder %s20, 1
      %p106 = por %p104, %p105
      %p108 = scmp.ne.s32.totalorder %s93, %s107
      %p109 = scmp.eq.s32.totalorder %s20, 0
      %p110 = por %p108, %p109
      %s111 = ssub.s32 %s14, %s21
      %p112 = scmp.eq.s32.totalorder %s111, 0
      %s114 = sadd.s32 %s113, 1
      %s115 = scalar_select %p112, %s113, %s114
      %p118 = pneg %p112
      %p119 = scmp.eq.s32.totalorder %s14, 1
      %p120 = por %p118, %p119
      %p121 = scmp.ne.s32.totalorder %s113, %s116
      %p122 = scmp.eq.s32.totalorder %s14, 0
      %p123 = por %p121, %p122
      %p124 = scmp.ne.s32.totalorder %s113, %s116
      %p125 = scmp.eq.s32.totalorder %s19, 1
      %p126 = por %p124, %p125
      %p127 = scmp.ne.s32.totalorder %s116, %s117
      %p128 = scmp.eq.s32.totalorder %s19, 0
      %p129 = por %p127, %p128
      %p130 = scmp.ne.s32.totalorder %s116, %s117
      %p131 = scmp.eq.s32.totalorder %s20, 1
      %p132 = por %p130, %p131
      %p134 = scmp.ne.s32.totalorder %s117, %s133
      %p135 = scmp.eq.s32.totalorder %s20, 0
      %p136 = por %p134, %p135
      %p137 = scmp.le.s32.totalorder 1, %s14
      %p138 = scmp.lt.s32.totalorder %s14, 3
      %p139 = pnand %p137, %p138
      %p140 = pneg %p139
      // Predicated region
      $region9: #{tpu_custom_call.1} parent=5 // pred_check
        _
      $region10: #{tpu_custom_call.1} parent=5 // pred_check_branch
        %142 = sbr.rel (%p139) target = $region12
      $region11: #{tpu_custom_call.1} parent=5 // pred_region
        %s143 = ssub.s32 %s14, 1
        // Predicated region
        $region13: #{tpu_custom_call.1} parent=11 // pred_check
          %p144 = pneg %p61
        $region14: #{tpu_custom_call.1} parent=11 // pred_check_branch
          %146 = sbr.rel (%p144) target = $region16
        $region15: #{tpu_custom_call.1} parent=11 // pred_region
          %s148 = ssub.s32 3072, 3072
          %149 = vsyncadd [#allocation3], %s148
          %s150 = sshll.u32 [#allocation2], 4
          %s151 = int_to_ptr.vmem [resolvable:$true] %s150
          %156 = dma.hbm_to_vmem [thread:$0]  %s1, 3072, %s151, [#allocation3], 384, 384, 24
        $region16: #{tpu_custom_call.1} parent=11 // pred_fallthru
          _
        // Predicated region
        $region17: #{tpu_custom_call.1} parent=11 // pred_check
          %p157 = pneg %p82
        $region18: #{tpu_custom_call.1} parent=11 // pred_check_branch
          %159 = sbr.rel (%p157) target = $region20
        $region19: #{tpu_custom_call.1} parent=11 // pred_region
          _
        $region20: #{tpu_custom_call.1} parent=11 // pred_fallthru
          _
        // Predicated region
        $region21: #{tpu_custom_call.1} parent=11 // pred_check
          %p160 = pneg %p103
        $region22: #{tpu_custom_call.1} parent=11 // pred_check_branch
          %162 = sbr.rel (%p160) target = $region24
        $region23: #{tpu_custom_call.1} parent=11 // pred_region
          _
        $region24: #{tpu_custom_call.1} parent=11 // pred_fallthru
          _
      $region12: #{tpu_custom_call.1} parent=5 // pred_fallthru
        _
      %p163 = scmp.lt.s32.totalorder %s14, 2
      // Predicated region
      $region25: #{tpu_custom_call.1} parent=5 // pred_check
        %p164 = pneg %p163
      $region26: #{tpu_custom_call.1} parent=5 // pred_check_branch
        %166 = sbr.rel (%p164) target = $region28
      $region27: #{tpu_custom_call.1} parent=5 // pred_region
        // Predicated region
        $region29: #{tpu_custom_call.1} parent=27 // pred_check
          %p167 = pneg %p34
        $region30: #{tpu_custom_call.1} parent=27 // pred_check_branch
          %169 = sbr.rel (%p167) target = $region32
        $region31: #{tpu_custom_call.1} parent=27 // pred_region
          %p170 = scmp.lt.s32.totalorder %s14, 1
          %s171 = scalar_select %p170, %s14, 1
          %s172 = smul.addr %s171, 2
          %s173 = smul.addr %s172, 8
          %s174 = scalar_lea.vmem %s0, %s173
        $region32: #{tpu_custom_call.1} parent=27 // pred_fallthru
          _
      $region28: #{tpu_custom_call.1} parent=5 // pred_fallthru
        _
      %p175 = scmp.le.s32.totalorder 1, %s14
      %p176 = scmp.lt.s32.totalorder %s14, 3
      %p177 = pnand %p175, %p176
      %p178 = pneg %p177
      // Predicated region
      $region33: #{tpu_custom_call.1} parent=5 // pred_check
        _
      $region34: #{tpu_custom_call.1} parent=5 // pred_check_branch
        %180 = sbr.rel (%p177) target = $region36
      $region35: #{tpu_custom_call.1} parent=5 // pred_region
        %s181 = ssub.s32 %s14, 1
        // Predicated region
        $region37: #{tpu_custom_call.1} parent=35 // pred_check
          %p182 = pneg %p61
        $region38: #{tpu_custom_call.1} parent=35 // pred_check_branch
          %184 = sbr.rel (%p182) target = $region40
        $region39: #{tpu_custom_call.1} parent=35 // pred_region
          %185 = dma.done [#allocation3], 3072
        $region40: #{tpu_custom_call.1} parent=35 // pred_fallthru
          _
        %p186 = scmp.lt.s32.totalorder %s19, 1
        %s187 = scalar_select %p186, %s19, 1
        %s188 = smul.addr %s187, 2
        %s189 = smul.addr %s188, 8
        %s190 = scalar_lea.vmem %s0, %s189
        %p191 = pneg %p40
        %p192 = pneg %p37
        %p193 = pneg %p61
        %p194 = pneg %p58
        %p195 = pneg %p82
        %p196 = pneg %p79
        %p197 = pneg %p103
        %p198 = pneg %p100
        %p199 = pneg %p129
        %p200 = pneg %p126
        %s201 = sand.u32 %s116, 1
        %s202 = scalar_lea.sflag [#allocation4], %s201
        %s203 = sand.u32 %s116, 1
        %s204 = smul.addr %s203, 64
        %s205 = scalar_lea.vmem [#allocation5], %s204
        %p206 = scmp.lt.s32.totalorder %s19, 1
        %s207 = scalar_select %p206, %s19, 1
        %s208 = smul.addr %s207, 2
        %s209 = smul.addr %s208, 8
        %s210 = scalar_lea.vmem %s0, %s209
        %v212 = vld [vmem:[%s210] sm:$0xff]
        %v213 = vld [vmem:[%s210 + $0x8] sm:$0xff]
        %v214 = vpack.c.bf16 %v213, %v212
        %v215 = vld [vmem:[#allocation2] sm:$0xff]
        %v216 = vld [vmem:[#allocation2 + $0x8] sm:$0xff]
        %v217 = vld [vmem:[#allocation2 + $0x10] sm:$0xff]
        %v218 = vld [vmem:[#allocation2 + $0x18] sm:$0xff]
        %v219 = vld [vmem:[#allocation2 + $0x20] sm:$0xff]
        %v220 = vld [vmem:[#allocation2 + $0x28] sm:$0xff]
        %v221 = vld [vmem:[#allocation2 + $0x30] sm:$0xff]
        %v222 = vld [vmem:[#allocation2 + $0x38] sm:$0xff]
        %v223 = vld [vmem:[#allocation2 + $0x40] sm:$0xff]
        %v224 = vld [vmem:[#allocation2 + $0x48] sm:$0xff]
        %v225 = vld [vmem:[#allocation2 + $0x50] sm:$0xff]
        %v226 = vld [vmem:[#allocation2 + $0x58] sm:$0xff]
        %v227 = vld [vmem:[#allocation2 + $0x60] sm:$0xff]
        %v228 = vld [vmem:[#allocation2 + $0x68] sm:$0xff]
        %v229 = vld [vmem:[#allocation2 + $0x70] sm:$0xff]
        %v230 = vld [vmem:[#allocation2 + $0x78] sm:$0xff]
        %v231 = vld [vmem:[#allocation2 + $0x80] sm:$0xff]
        %v232 = vld [vmem:[#allocation2 + $0x88] sm:$0xff]
        %v233 = vld [vmem:[#allocation2 + $0x90] sm:$0xff]
        %v234 = vld [vmem:[#allocation2 + $0x98] sm:$0xff]
        %v235 = vld [vmem:[#allocation2 + $0xa0] sm:$0xff]
        %v236 = vld [vmem:[#allocation2 + $0xa8] sm:$0xff]
        %v237 = vld [vmem:[#allocation2 + $0xb0] sm:$0xff]
        %v238 = vld [vmem:[#allocation2 + $0xb8] sm:$0xff]
        %v263 = vunpack.c.l.b16 %v215
        %v264 = vunpack.c.h.b16 %v215
        %v265 = vunpack.c.l.b16 %v216
        %v266 = vunpack.c.h.b16 %v216
        %v267 = vunpack.c.l.b16 %v217
        %v268 = vunpack.c.h.b16 %v217
        %v269 = vunpack.c.l.b16 %v218
        %v270 = vunpack.c.h.b16 %v218
        %v271 = vunpack.c.l.b16 %v219
        %v272 = vunpack.c.h.b16 %v219
        %v273 = vunpack.c.l.b16 %v220
        %v274 = vunpack.c.h.b16 %v220
        %v275 = vunpack.c.l.b16 %v221
        %v276 = vunpack.c.h.b16 %v221
        %v277 = vunpack.c.l.b16 %v222
        %v278 = vunpack.c.h.b16 %v222
        %v279 = vunpack.c.l.b16 %v223
        %v280 = vunpack.c.h.b16 %v223
        %v281 = vunpack.c.l.b16 %v224
        %v282 = vunpack.c.h.b16 %v224
        %v283 = vunpack.c.l.b16 %v225
        %v284 = vunpack.c.h.b16 %v225
        %v285 = vunpack.c.l.b16 %v226
        %v286 = vunpack.c.h.b16 %v226
        %v287 = vunpack.c.l.b16 %v227
        %v288 = vunpack.c.h.b16 %v227
        %v289 = vunpack.c.l.b16 %v228
        %v290 = vunpack.c.h.b16 %v228
        %v291 = vunpack.c.l.b16 %v229
        %v292 = vunpack.c.h.b16 %v229
        %v293 = vunpack.c.l.b16 %v230
        %v294 = vunpack.c.h.b16 %v230
        %v295 = vunpack.c.l.b16 %v231
        %v296 = vunpack.c.h.b16 %v231
        %v297 = vunpack.c.l.b16 %v232
        %v298 = vunpack.c.h.b16 %v232
        %v299 = vunpack.c.l.b16 %v233
        %v300 = vunpack.c.h.b16 %v233
        %v301 = vunpack.c.l.b16 %v234
        %v302 = vunpack.c.h.b16 %v234
        %v303 = vunpack.c.l.b16 %v235
        %v304 = vunpack.c.h.b16 %v235
        %v305 = vunpack.c.l.b16 %v236
        %v306 = vunpack.c.h.b16 %v236
        %v307 = vunpack.c.l.b16 %v237
        %v308 = vunpack.c.h.b16 %v237
        %v309 = vunpack.c.l.b16 %v238
        %v310 = vunpack.c.h.b16 %v238
        %v311 = vpack.c.b16 %v269, %v263
        %v312 = vpack.c.b16 %v270, %v264
        %v313 = vpack.c.b16 %v271, %v265
        %v314 = vpack.c.b16 %v272, %v266
        %v315 = vpack.c.b16 %v273, %v267
        %v316 = vpack.c.b16 %v274, %v268
        %v317 = vpack.c.b16 %v281, %v275
        %v318 = vpack.c.b16 %v282, %v276
        %v319 = vpack.c.b16 %v283, %v277
        %v320 = vpack.c.b16 %v284, %v278
        %v321 = vpack.c.b16 %v285, %v279
        %v322 = vpack.c.b16 %v286, %v280
        %v323 = vpack.c.b16 %v293, %v287
        %v324 = vpack.c.b16 %v294, %v288
        %v325 = vpack.c.b16 %v295, %v289
        %v326 = vpack.c.b16 %v296, %v290
        %v327 = vpack.c.b16 %v297, %v291
        %v328 = vpack.c.b16 %v298, %v292
        %v329 = vpack.c.b16 %v305, %v299
        %v330 = vpack.c.b16 %v306, %v300
        %v331 = vpack.c.b16 %v307, %v301
        %v332 = vpack.c.b16 %v308, %v302
        %v333 = vpack.c.b16 %v309, %v303
        %v334 = vpack.c.b16 %v310, %v304
        %vm359 = vcmask 523264
        %v361 = vsel %vm359, %v214, 0
        %363 = vmatprep.subr.bf16.mxu0 0
        %364 = vmatpush1.bf16.msra.mxu0 0
        %365 = vmatprep.subr.bf16.mxu0 0
        %366 = vmatpush1.bf16.msra.mxu0 0
        %367 = vmatprep.subr.bf16.mxu0 0
        %368 = vmatpush1.bf16.msra.mxu0 0
        %369 = vmatprep.subr.bf16.mxu0 0
        %370 = vmatpush1.bf16.msra.mxu0 0
        %371 = vmatprep.subr.bf16.mxu0 %v330
        %372 = vmatpush1.bf16.msra.mxu0 %v329
        %373 = vmatprep.subr.bf16.mxu0 %v324
        %374 = vmatpush1.bf16.msra.mxu0 %v323
        %375 = vmatprep.subr.bf16.mxu0 %v318
        %376 = vmatpush1.bf16.msra.mxu0 %v317
        %377 = vmatprep.subr.bf16.mxu0 %v312
        %378 = vmatpush1.bf16.msra.mxu0 %v311
        %379 = vmatprep.subr.bf16.mxu0 0
        %380 = vmatpush2.bf16.msra.mxu0 0
        %381 = vmatprep.subr.bf16.mxu0 0
        %382 = vmatpush2.bf16.msra.mxu0 0
        %383 = vmatprep.subr.bf16.mxu0 0
        %384 = vmatpush2.bf16.msra.mxu0 0
        %385 = vmatprep.subr.bf16.mxu0 0
        %386 = vmatpush2.bf16.msra.mxu0 0
        %387 = vmatprep.subr.bf16.mxu0 0
        %388 = vmatpush2.bf16.msra.mxu0 0
        %389 = vmatprep.subr.bf16.mxu0 0
        %390 = vmatpush2.bf16.msra.mxu0 0
        %391 = vmatprep.subr.bf16.mxu0 0
        %392 = vmatpush2.bf16.msra.mxu0 0
        %393 = vmatprep.subr.bf16.mxu0 0
        %394 = vmatpush2.bf16.msra.mxu0 0
        %395 = vmatprep.mubr.bf16.mxu0 0
        %396 = vmatmul.mubr.bf16.gmra.mxu0 %v361
        %v397 = vpop.f32.mrf.mxu0
        %v398 = vadd.f32 0.0, %v397
        %v399 = vpop.f32.mrf.mxu0
        %v400 = vadd.f32 0.0, %v399
        %v401 = vpop.f32.mrf.mxu0
        %v402 = vadd.f32 0.0, %v401
        %v403 = vpop.f32.mrf.mxu0
        %v404 = vadd.f32 0.0, %v403
        %405 = vdwg.mxu0
        %406 = vmatprep.subr.bf16.mxu0 0
        %407 = vmatpush1.bf16.msra.mxu0 0
        %408 = vmatprep.subr.bf16.mxu0 0
        %409 = vmatpush1.bf16.msra.mxu0 0
        %410 = vmatprep.subr.bf16.mxu0 0
        %411 = vmatpush1.bf16.msra.mxu0 0
        %412 = vmatprep.subr.bf16.mxu0 0
        %413 = vmatpush1.bf16.msra.mxu0 0
        %414 = vmatprep.subr.bf16.mxu0 %v332
        %415 = vmatpush1.bf16.msra.mxu0 %v331
        %416 = vmatprep.subr.bf16.mxu0 %v326
        %417 = vmatpush1.bf16.msra.mxu0 %v325
        %418 = vmatprep.subr.bf16.mxu0 %v320
        %419 = vmatpush1.bf16.msra.mxu0 %v319
        %420 = vmatprep.subr.bf16.mxu0 %v314
        %421 = vmatpush1.bf16.msra.mxu0 %v313
        %422 = vmatprep.subr.bf16.mxu0 0
        %423 = vmatpush2.bf16.msra.mxu0 0
        %424 = vmatprep.subr.bf16.mxu0 0
        %425 = vmatpush2.bf16.msra.mxu0 0
        %426 = vmatprep.subr.bf16.mxu0 0
        %427 = vmatpush2.bf16.msra.mxu0 0
        %428 = vmatprep.subr.bf16.mxu0 0
        %429 = vmatpush2.bf16.msra.mxu0 0
        %430 = vmatprep.subr.bf16.mxu0 0
        %431 = vmatpush2.bf16.msra.mxu0 0
        %432 = vmatprep.subr.bf16.mxu0 0
        %433 = vmatpush2.bf16.msra.mxu0 0
        %434 = vmatprep.subr.bf16.mxu0 0
        %435 = vmatpush2.bf16.msra.mxu0 0
        %436 = vmatprep.subr.bf16.mxu0 0
        %437 = vmatpush2.bf16.msra.mxu0 0
        %438 = vmatprep.mubr.bf16.mxu0 0
        %439 = vmatmul.mubr.bf16.gmra.mxu0 %v361
        %v440 = vpop.f32.mrf.mxu0
        %v441 = vadd.f32 0.0, %v440
        %v442 = vpop.f32.mrf.mxu0
        %v443 = vadd.f32 0.0, %v442
        %v444 = vpop.f32.mrf.mxu0
        %v445 = vadd.f32 0.0, %v444
        %v446 = vpop.f32.mrf.mxu0
        %v447 = vadd.f32 0.0, %v446
        %448 = vdwg.mxu0
        %449 = vmatprep.subr.bf16.mxu0 0
        %450 = vmatpush1.bf16.msra.mxu0 0
        %451 = vmatprep.subr.bf16.mxu0 0
        %452 = vmatpush1.bf16.msra.mxu0 0
        %453 = vmatprep.subr.bf16.mxu0 0
        %454 = vmatpush1.bf16.msra.mxu0 0
        %455 = vmatprep.subr.bf16.mxu0 0
        %456 = vmatpush1.bf16.msra.mxu0 0
        %457 = vmatprep.subr.bf16.mxu0 %v334
        %458 = vmatpush1.bf16.msra.mxu0 %v333
        %459 = vmatprep.subr.bf16.mxu0 %v328
        %460 = vmatpush1.bf16.msra.mxu0 %v327
        %461 = vmatprep.subr.bf16.mxu0 %v322
        %462 = vmatpush1.bf16.msra.mxu0 %v321
        %463 = vmatprep.subr.bf16.mxu0 %v316
        %464 = vmatpush1.bf16.msra.mxu0 %v315
        %465 = vmatprep.subr.bf16.mxu0 0
        %466 = vmatpush2.bf16.msra.mxu0 0
        %467 = vmatprep.subr.bf16.mxu0 0
        %468 = vmatpush2.bf16.msra.mxu0 0
        %469 = vmatprep.subr.bf16.mxu0 0
        %470 = vmatpush2.bf16.msra.mxu0 0
        %471 = vmatprep.subr.bf16.mxu0 0
        %472 = vmatpush2.bf16.msra.mxu0 0
        %473 = vmatprep.subr.bf16.mxu0 0
        %474 = vmatpush2.bf16.msra.mxu0 0
        %475 = vmatprep.subr.bf16.mxu0 0
        %476 = vmatpush2.bf16.msra.mxu0 0
        %477 = vmatprep.subr.bf16.mxu0 0
        %478 = vmatpush2.bf16.msra.mxu0 0
        %479 = vmatprep.subr.bf16.mxu0 0
        %480 = vmatpush2.bf16.msra.mxu0 0
        %481 = vmatprep.mubr.bf16.mxu0 0
        %482 = vmatmul.mubr.bf16.gmra.mxu0 %v361
        %v483 = vpop.f32.mrf.mxu0
        %v484 = vadd.f32 0.0, %v483
        %v485 = vpop.f32.mrf.mxu0
        %v486 = vadd.f32 0.0, %v485
        %v487 = vpop.f32.mrf.mxu0
        %v488 = vadd.f32 0.0, %v487
        %v489 = vpop.f32.mrf.mxu0
        %v490 = vadd.f32 0.0, %v489
        %491 = vdwg.mxu0
        %v492 = vpack.c.bf16 %v402, %v398
        %v493 = vpack.c.bf16 %v404, %v400
        %v494 = vpack.c.bf16 %v445, %v441
        %v495 = vpack.c.bf16 %v447, %v443
        %v496 = vpack.c.bf16 %v488, %v484
        %v497 = vpack.c.bf16 %v490, %v486
        %v498 = vld [vmem:[%s2] sm:$0xf]
        %v499 = vld [vmem:[%s2 + $0x4] sm:$0xf]
        %v500 = vld [vmem:[%s2 + $0x8] sm:$0xf]
        %v501 = vld [vmem:[%s2 + $0xc] sm:$0xf]
        %s502 = scalar_lea.vmem %s2, 16
        %v503 = vld [vmem:[%s502] sm:$0xf]
        %v504 = vld [vmem:[%s502 + $0x4] sm:$0xf]
        %v505 = vld [vmem:[%s502 + $0x8] sm:$0xf]
        %v506 = vld [vmem:[%s502 + $0xc] sm:$0xf]
        %v511 = vunpack.c.l.b16 %v503
        %v512 = vunpack.c.l.b16 %v504
        %v513 = vunpack.c.l.b16 %v505
        %v514 = vunpack.c.l.b16 %v506
        %v515 = vpack.c.b16 %v512, %v511
        %v516 = vpack.c.b16 %v514, %v513
        %vm517 = vcmask 130048
        %v519 = vsel %vm517, %v515, 0
        %v522 = vsel %vm517, %v516, 0
        %524 = vmatprep.subr.bf16.mxu0 0
        %525 = vmatpush1.bf16.msra.mxu0 0
        %526 = vmatprep.subr.bf16.mxu0 0
        %527 = vmatpush1.bf16.msra.mxu0 0
        %528 = vmatprep.subr.bf16.mxu0 0
        %529 = vmatpush1.bf16.msra.mxu0 0
        %530 = vmatprep.subr.bf16.mxu0 0
        %531 = vmatpush1.bf16.msra.mxu0 0
        %532 = vmatprep.subr.bf16.mxu0 0
        %533 = vmatpush1.bf16.msra.mxu0 0
        %534 = vmatprep.subr.bf16.mxu0 0
        %535 = vmatpush1.bf16.msra.mxu0 0
        %536 = vmatprep.subr.bf16.mxu0 0
        %537 = vmatpush1.bf16.msra.mxu0 0
        %538 = vmatprep.subr.bf16.mxu0 %v495
        %539 = vmatpush1.bf16.msra.mxu0 %v494
        %540 = vmatprep.subr.bf16.mxu0 0
        %541 = vmatpush2.bf16.msra.mxu0 0
        %542 = vmatprep.subr.bf16.mxu0 0
        %543 = vmatpush2.bf16.msra.mxu0 0
        %544 = vmatprep.subr.bf16.mxu0 0
        %545 = vmatpush2.bf16.msra.mxu0 0
        %546 = vmatprep.subr.bf16.mxu0 0
        %547 = vmatpush2.bf16.msra.mxu0 0
        %548 = vmatprep.subr.bf16.mxu0 0
        %549 = vmatpush2.bf16.msra.mxu0 0
        %550 = vmatprep.subr.bf16.mxu0 0
        %551 = vmatpush2.bf16.msra.mxu0 0
        %552 = vmatprep.subr.bf16.mxu0 0
        %553 = vmatpush2.bf16.msra.mxu0 0
        %554 = vmatprep.subr.bf16.mxu0 0
        %555 = vmatpush2.bf16.msra.mxu0 0
        %556 = vmatprep.mubr.bf16.mxu0 0
        %557 = vmatmul.mubr.bf16.gmra.mxu0 %v519
        %v558 = vpop.f32.mrf.mxu0
        %v559 = vadd.f32 0.0, %v558
        %v560 = vpop.f32.mrf.mxu0
        %v561 = vadd.f32 0.0, %v560
        %v562 = vpop.f32.mrf.mxu0
        %v563 = vadd.f32 0.0, %v562
        %v564 = vpop.f32.mrf.mxu0
        %v565 = vadd.f32 0.0, %v564
        %566 = vmatprep.mubr.bf16.mxu0 0
        %567 = vmatmul.mubr.bf16.gmra.mxu0 %v522
        %v568 = vpop.f32.mrf.mxu0
        %v569 = vadd.f32 0.0, %v568
        %v570 = vpop.f32.mrf.mxu0
        %v571 = vadd.f32 0.0, %v570
        %v572 = vpop.f32.mrf.mxu0
        %v573 = vadd.f32 0.0, %v572
        %v574 = vpop.f32.mrf.mxu0
        %v575 = vadd.f32 0.0, %v574
        %576 = vdwg.mxu0
        %v581 = vunpack.c.l.b16 %v498
        %v582 = vunpack.c.l.b16 %v499
        %v583 = vunpack.c.l.b16 %v500
        %v584 = vunpack.c.l.b16 %v501
        %v585 = vpack.c.b16 %v582, %v581
        %v586 = vpack.c.b16 %v584, %v583
        %v588 = vsel %vm517, %v585, 0
        %v591 = vsel %vm517, %v586, 0
        %593 = vmatprep.subr.bf16.mxu0 0
        %594 = vmatpush1.bf16.msra.mxu0 0
        %595 = vmatprep.subr.bf16.mxu0 0
        %596 = vmatpush1.bf16.msra.mxu0 0
        %597 = vmatprep.subr.bf16.mxu0 0
        %598 = vmatpush1.bf16.msra.mxu0 0
        %599 = vmatprep.subr.bf16.mxu0 0
        %600 = vmatpush1.bf16.msra.mxu0 0
        %601 = vmatprep.subr.bf16.mxu0 0
        %602 = vmatpush1.bf16.msra.mxu0 0
        %603 = vmatprep.subr.bf16.mxu0 0
        %604 = vmatpush1.bf16.msra.mxu0 0
        %605 = vmatprep.subr.bf16.mxu0 0
        %606 = vmatpush1.bf16.msra.mxu0 0
        %607 = vmatprep.subr.bf16.mxu0 %v493
        %608 = vmatpush1.bf16.msra.mxu0 %v492
        %609 = vmatprep.subr.bf16.mxu0 0
        %610 = vmatpush2.bf16.msra.mxu0 0
        %611 = vmatprep.subr.bf16.mxu0 0
        %612 = vmatpush2.bf16.msra.mxu0 0
        %613 = vmatprep.subr.bf16.mxu0 0
        %614 = vmatpush2.bf16.msra.mxu0 0
        %615 = vmatprep.subr.bf16.mxu0 0
        %616 = vmatpush2.bf16.msra.mxu0 0
        %617 = vmatprep.subr.bf16.mxu0 0
        %618 = vmatpush2.bf16.msra.mxu0 0
        %619 = vmatprep.subr.bf16.mxu0 0
        %620 = vmatpush2.bf16.msra.mxu0 0
        %621 = vmatprep.subr.bf16.mxu0 0
        %622 = vmatpush2.bf16.msra.mxu0 0
        %623 = vmatprep.subr.bf16.mxu0 0
        %624 = vmatpush2.bf16.msra.mxu0 0
        %625 = vmatprep.mubr.bf16.mxu0 0
        %626 = vmatmul.mubr.bf16.gmra.mxu0 %v588
        %v627 = vpop.f32.mrf.mxu0
        %v628 = vadd.f32 %v559, %v627
        %v629 = vpop.f32.mrf.mxu0
        %v630 = vadd.f32 %v561, %v629
        %v631 = vpop.f32.mrf.mxu0
        %v632 = vadd.f32 %v563, %v631
        %v633 = vpop.f32.mrf.mxu0
        %v634 = vadd.f32 %v565, %v633
        %635 = vmatprep.mubr.bf16.mxu0 0
        %636 = vmatmul.mubr.bf16.gmra.mxu0 %v591
        %v637 = vpop.f32.mrf.mxu0
        %v638 = vadd.f32 %v569, %v637
        %v639 = vpop.f32.mrf.mxu0
        %v640 = vadd.f32 %v571, %v639
        %v641 = vpop.f32.mrf.mxu0
        %v642 = vadd.f32 %v573, %v641
        %v643 = vpop.f32.mrf.mxu0
        %v644 = vadd.f32 %v575, %v643
        %645 = vdwg.mxu0
        %s646 = scalar_lea.vmem %s2, 32
        %v647 = vld [vmem:[%s646] sm:$0xf]
        %v648 = vld [vmem:[%s646 + $0x4] sm:$0xf]
        %v649 = vld [vmem:[%s646 + $0x8] sm:$0xf]
        %v650 = vld [vmem:[%s646 + $0xc] sm:$0xf]
        %v655 = vunpack.c.l.b16 %v647
        %v656 = vunpack.c.l.b16 %v648
        %v657 = vunpack.c.l.b16 %v649
        %v658 = vunpack.c.l.b16 %v650
        %v659 = vpack.c.b16 %v656, %v655
        %v660 = vpack.c.b16 %v658, %v657
        %v662 = vsel %vm517, %v659, 0
        %v665 = vsel %vm517, %v660, 0
        %667 = vmatprep.subr.bf16.mxu0 0
        %668 = vmatpush1.bf16.msra.mxu0 0
        %669 = vmatprep.subr.bf16.mxu0 0
        %670 = vmatpush1.bf16.msra.mxu0 0
        %671 = vmatprep.subr.bf16.mxu0 0
        %672 = vmatpush1.bf16.msra.mxu0 0
        %673 = vmatprep.subr.bf16.mxu0 0
        %674 = vmatpush1.bf16.msra.mxu0 0
        %675 = vmatprep.subr.bf16.mxu0 0
        %676 = vmatpush1.bf16.msra.mxu0 0
        %677 = vmatprep.subr.bf16.mxu0 0
        %678 = vmatpush1.bf16.msra.mxu0 0
        %679 = vmatprep.subr.bf16.mxu0 0
        %680 = vmatpush1.bf16.msra.mxu0 0
        %681 = vmatprep.subr.bf16.mxu0 %v497
        %682 = vmatpush1.bf16.msra.mxu0 %v496
        %683 = vmatprep.subr.bf16.mxu0 0
        %684 = vmatpush2.bf16.msra.mxu0 0
        %685 = vmatprep.subr.bf16.mxu0 0
        %686 = vmatpush2.bf16.msra.mxu0 0
        %687 = vmatprep.subr.bf16.mxu0 0
        %688 = vmatpush2.bf16.msra.mxu0 0
        %689 = vmatprep.subr.bf16.mxu0 0
        %690 = vmatpush2.bf16.msra.mxu0 0
        %691 = vmatprep.subr.bf16.mxu0 0
        %692 = vmatpush2.bf16.msra.mxu0 0
        %693 = vmatprep.subr.bf16.mxu0 0
        %694 = vmatpush2.bf16.msra.mxu0 0
        %695 = vmatprep.subr.bf16.mxu0 0
        %696 = vmatpush2.bf16.msra.mxu0 0
        %697 = vmatprep.subr.bf16.mxu0 0
        %698 = vmatpush2.bf16.msra.mxu0 0
        %699 = vmatprep.mubr.bf16.mxu0 0
        %700 = vmatmul.mubr.bf16.gmra.mxu0 %v662
        %v701 = vpop.f32.mrf.mxu0
        %v702 = vadd.f32 0.0, %v701
        %v703 = vpop.f32.mrf.mxu0
        %v704 = vadd.f32 0.0, %v703
        %v705 = vpop.f32.mrf.mxu0
        %v706 = vadd.f32 0.0, %v705
        %v707 = vpop.f32.mrf.mxu0
        %v708 = vadd.f32 0.0, %v707
        %709 = vmatprep.mubr.bf16.mxu0 0
        %710 = vmatmul.mubr.bf16.gmra.mxu0 %v665
        %v711 = vpop.f32.mrf.mxu0
        %v712 = vadd.f32 0.0, %v711
        %v713 = vpop.f32.mrf.mxu0
        %v714 = vadd.f32 0.0, %v713
        %v715 = vpop.f32.mrf.mxu0
        %v716 = vadd.f32 0.0, %v715
        %v717 = vpop.f32.mrf.mxu0
        %v718 = vadd.f32 0.0, %v717
        %719 = vdwg.mxu0
        %v720 = vadd.f32 %v628, %v702
        %v721 = vadd.f32 %v630, %v704
        %v722 = vadd.f32 %v632, %v706
        %v723 = vadd.f32 %v634, %v708
        %v724 = vadd.f32 %v638, %v712
        %v725 = vadd.f32 %v640, %v714
        %v726 = vadd.f32 %v642, %v716
        %v727 = vadd.f32 %v644, %v718
        %v728 = vld [vmem:[%s3] sm:$0x3]
        %v730 = vlaneseq
        %v731 = vshrl.u32 %v730, 7
        %v732 = vsub.s32 0, %v731
        %v733 = vrot.slane %v728, %v732
        %v734 = vlaneseq
        %v735 = vshrl.u32 %v734, 7
        %v736 = vsub.s32 1, %v735
        %v737 = vrot.slane %v728, %v736
        %v740 = vadd.f32 %v720, %v733
        %v741 = vadd.f32 %v721, %v737
        %v742 = vadd.f32 %v722, %v733
        %v743 = vadd.f32 %v723, %v737
        %v744 = vadd.f32 %v724, %v733
        %v745 = vadd.f32 %v725, %v737
        %v746 = vadd.f32 %v726, %v733
        %v747 = vadd.f32 %v727, %v737
        %748 = vst [vmem:[%s205] sm:$0xff] %v740
        %749 = vst [vmem:[%s205 + $0x8] sm:$0xff] %v741
        %750 = vst [vmem:[%s205 + $0x10] sm:$0xff] %v742
        %751 = vst [vmem:[%s205 + $0x18] sm:$0xff] %v743
        %752 = vst [vmem:[%s205 + $0x20] sm:$0xff] %v744
        %753 = vst [vmem:[%s205 + $0x28] sm:$0xff] %v745
        %754 = vst [vmem:[%s205 + $0x30] sm:$0xff] %v746
        %755 = vst [vmem:[%s205 + $0x38] sm:$0xff] %v747
        %s756 = sand.u32 %s116, 1
        %s757 = scalar_lea.sflag [#allocation4], %s756
        %s758 = sand.u32 %s116, 1
        %s759 = smul.addr %s758, 64
        %s760 = scalar_lea.vmem [#allocation5], %s759
        // Predicated region
        $region41: #{tpu_custom_call.1} parent=35 // pred_check
          %p761 = pneg %p126
        $region42: #{tpu_custom_call.1} parent=35 // pred_check_branch
          %763 = sbr.rel (%p761) target = $region44
        $region43: #{tpu_custom_call.1} parent=35 // pred_region
          %s765 = ssub.s32 1024, 1024
          %766 = vsyncadd %s757, %s765
          %s767 = smul.addr %s19, 8
          %s768 = smul.addr %s767, 128
          %s769 = scalar_lea.hbm %s4, %s768
          %s770 = sshll.u32 %s760, 4
          %s771 = int_to_ptr.vmem [resolvable:$true] %s770
          %776 = dma.vmem_to_hbm [thread:$0]  %s771, 1024, %s769, %s757, 256, 256, 16
        $region44: #{tpu_custom_call.1} parent=35 // pred_fallthru
          _
      $region36: #{tpu_custom_call.1} parent=5 // pred_fallthru
        _
      %p777 = scmp.le.s32.totalorder 2, %s14
      // Predicated region
      $region45: #{tpu_custom_call.1} parent=5 // pred_check
        %p778 = pneg %p777
      $region46: #{tpu_custom_call.1} parent=5 // pred_check_branch
        %780 = sbr.rel (%p778) target = $region48
      $region47: #{tpu_custom_call.1} parent=5 // pred_region
        %s781 = ssub.s32 %s14, 2
        // Predicated region
        $region49: #{tpu_custom_call.1} parent=47 // pred_check
          %p782 = pneg %p132
        $region50: #{tpu_custom_call.1} parent=47 // pred_check_branch
          %784 = sbr.rel (%p782) target = $region52
        $region51: #{tpu_custom_call.1} parent=47 // pred_region
          %s785 = sand.u32 %s117, 1
          %s786 = scalar_lea.sflag [#allocation4], %s785
          %s787 = sand.u32 %s117, 1
          %s788 = smul.addr %s787, 64
          %s789 = scalar_lea.vmem [#allocation5], %s788
          %790 = dma.done %s786, 1024
        $region52: #{tpu_custom_call.1} parent=47 // pred_fallthru
          _
      $region48: #{tpu_custom_call.1} parent=5 // pred_fallthru
        _
    $region6: #{tpu_custom_call.1} parent=1 // loop_footer
      %s18 = sadd.s32 1, %s14
    $region7: #{tpu_custom_call.1} parent=1 // loop_footer_branch
      %13 = sbr.rel target = $region3
    $region8: #{tpu_custom_call.1} parent=1 // loop_exit
      _
    %791 = vsyncpa [#allocation3], 1
    %s792 = scalar_lea.sflag [#allocation3], 1
    %793 = vsyncpa %s792, 1
    %794 = vsyncpa [#allocation4], 1
    %s795 = scalar_lea.sflag [#allocation4], 1
    %796 = vsyncpa %s795, 1

</llo_original>
